<compile_context>
chip_gen: v7x
topology: tpu7x:2x2x1
jax: 0.10.0
libtpu: 0.0.40
codegen_flags: <defaults>
</compile_context>

<pallas_src>
import functools

import jax
import jax.numpy as jnp
import numpy as np
from jax.experimental import pallas as pl
from jax.experimental.pallas import tpu as pltpu


def _basic_block_kernel(x_ref, w1_ref, w2_ref, a1_ref, c1_ref, a2_ref, c2_ref,
                        ml_ref, mr_ref, o_ref, xpad_ref, patch_ref, *, W, halo):
    """Fused Conv3x3+BN+ReLU -> Conv3x3+BN -> +residual -> ReLU for one image."""
    C = x_ref.shape[1]
    P = x_ref.shape[2]
    Ppad = xpad_ref.shape[1]

    mask_l = ml_ref[...]            # (1, P): 0.0 where w == 0   (for ox = -1 taps)
    mask_r = mr_ref[...]            # (1, P): 0.0 where w == W-1 (for ox = +1 taps)
    offs = [(oy, ox) for oy in (-1, 0, 1) for ox in (-1, 0, 1)]   # tap order = ky*3+kx

    # Zero the padded flat-pixel buffer; the left/right halos stay zero and act
    # as the zero padding (rows outside the image) for BOTH convolutions.
    xpad_ref[...] = jnp.zeros((C, Ppad), jnp.float32)

    def im2col_3x3(v):
        # v: (C, P) f32 -> fill patch_ref (9*C, P) with the 9 shifted taps.
        xpad_ref[:, halo:halo + P] = v              # lane-aligned interior store
        for t, (oy, ox) in enumerate(offs):
            off = halo + oy * W + ox                # static window start
            win = xpad_ref[:, off:off + P]          # (C, P) shifted window
            if ox == -1:
                win = win * mask_l                  # zero taps crossing left edge
            elif ox == 1:
                win = win * mask_r                  # zero taps crossing right edge
            patch_ref[t * C:(t + 1) * C, :] = win

    x = x_ref[0].astype(jnp.float32)                # (C, P), also the residual

    # conv1 (3x3, pad=1) -> folded BN1 -> ReLU   (single MXU matmul + VPU epilogue)
    im2col_3x3(x)
    z1 = jnp.dot(w1_ref[...], patch_ref[...], preferred_element_type=jnp.float32)
    y1 = jnp.maximum(z1 * a1_ref[...] + c1_ref[...], 0.0)

    # conv2 (3x3, pad=1) -> folded BN2 -> + residual -> ReLU -> single store
    im2col_3x3(y1)
    z2 = jnp.dot(w2_ref[...], patch_ref[...], preferred_element_type=jnp.float32)
    y2 = z2 * a2_ref[...] + c2_ref[...]
    o_ref[0] = jnp.maximum(y2 + x, 0.0).astype(o_ref.dtype)


def basic_block_forward(x, w1, b1, bn1, w2, b2, bn2, *, eps=1e-5):
    """BasicBlock forward.  x: (N, C, H, W) NCHW; convs (C, C, 3, 3) + (C,) bias;
    bn1/bn2: dicts with 'gamma', 'beta', 'mean', 'var' (eval-mode running stats)."""
    N, C, H, W = x.shape
    P = H * W
    halo = ((W + 1 + 127) // 128) * 128          # lane-aligned halo >= W+1
    Ppad = P + 2 * halo

    # ---- fold conv bias + eval-mode BatchNorm into per-channel scale/bias ----
    def fold(conv_b, bn):
        a = bn["gamma"] / jnp.sqrt(bn["var"] + eps)          # (C,)
        c = (conv_b - bn["mean"]) * a + bn["beta"]           # (C,)
        return (a.reshape(C, 1).astype(jnp.float32),
                c.reshape(C, 1).astype(jnp.float32))

    a1, c1 = fold(b1, bn1)
    a2, c2 = fold(b2, bn2)

    # Tap-major flattened weights: (C_out, 9*C_in), tap index = ky*3 + kx.
    w1_flat = jnp.transpose(w1, (0, 2, 3, 1)).reshape(C, 9 * C).astype(jnp.float32)
    w2_flat = jnp.transpose(w2, (0, 2, 3, 1)).reshape(C, 9 * C).astype(jnp.float32)

    # Column-validity masks (host-side constants): zero out taps that would read
    # across the left/right image border in flattened-pixel space.
    col = np.arange(P) % W
    mask_l = jnp.asarray((col != 0).astype(np.float32)).reshape(1, P)
    mask_r = jnp.asarray((col != W - 1).astype(np.float32)).reshape(1, P)

    # (N, C, H*W): metadata-only reshape of the contiguous NCHW buffer.
    x_cp = x.reshape(N, C, P)

    kernel = functools.partial(_basic_block_kernel, W=W, halo=halo)
    out = pl.pallas_call(
        kernel,
        out_shape=jax.ShapeDtypeStruct((N, C, P), x.dtype),
        grid_spec=pltpu.PrefetchScalarGridSpec(
            num_scalar_prefetch=0,
            grid=(N,),
            in_specs=[
                pl.BlockSpec((1, C, P), lambda n: (n, 0, 0)),   # x (per image)
                pl.BlockSpec((C, 9 * C), lambda n: (0, 0)),     # w1_flat
                pl.BlockSpec((C, 9 * C), lambda n: (0, 0)),     # w2_flat
                pl.BlockSpec((C, 1), lambda n: (0, 0)),         # BN1 scale
                pl.BlockSpec((C, 1), lambda n: (0, 0)),         # BN1 bias
                pl.BlockSpec((C, 1), lambda n: (0, 0)),         # BN2 scale
                pl.BlockSpec((C, 1), lambda n: (0, 0)),         # BN2 bias
                pl.BlockSpec((1, P), lambda n: (0, 0)),         # left-edge mask
                pl.BlockSpec((1, P), lambda n: (0, 0)),         # right-edge mask
            ],
            out_specs=pl.BlockSpec((1, C, P), lambda n: (n, 0, 0)),
            scratch_shapes=[
                pltpu.VMEM((C, Ppad), jnp.float32),     # zero-haloed flat pixels
                pltpu.VMEM((9 * C, P), jnp.float32),    # im2col patch matrix
            ],
        ),
        compiler_params=pltpu.CompilerParams(
            dimension_semantics=("parallel",),          # batch items independent
        ),
    )(x_cp, w1_flat, w2_flat, a1, c1, a2, c2, mask_l, mask_r)

    return out.reshape(N, C, H, W)


# ----------------- pure-JAX reference (mirrors the PyTorch module) -----------------
def _ref_conv3x3(x, w, b):
    y = jax.lax.conv_general_dilated(
        x, w, window_strides=(1, 1), padding=((1, 1), (1, 1)),
        dimension_numbers=("NCHW", "OIHW", "NCHW"),
        precision=jax.lax.Precision.HIGHEST)
    return y + b[None, :, None, None]


def _ref_bn(x, bn, eps=1e-5):
    g = bn["gamma"][None, :, None, None]
    b = bn["beta"][None, :, None, None]
    m = bn["mean"][None, :, None, None]
    v = bn["var"][None, :, None, None]
    return g * (x - m) / jnp.sqrt(v + eps) + b


def _ref_basic_block(x, w1, b1, bn1, w2, b2, bn2):
    residual = x
    y = jax.nn.relu(_ref_bn(_ref_conv3x3(x, w1, b1), bn1))
    y = _ref_bn(_ref_conv3x3(y, w2, b2), bn2)
    return jax.nn.relu(y + residual)


if __name__ == "__main__":
    N, C, H, W = 2, 4, 16, 16
    key = jax.random.PRNGKey(0)
    ks = jax.random.split(key, 13)

    x = jax.random.normal(ks[0], (N, C, H, W), dtype=jnp.float32)
    w1 = 0.2 * jax.random.normal(ks[1], (C, C, 3, 3), dtype=jnp.float32)
    b1 = 0.1 * jax.random.normal(ks[2], (C,), dtype=jnp.float32)
    w2 = 0.2 * jax.random.normal(ks[3], (C, C, 3, 3), dtype=jnp.float32)
    b2 = 0.1 * jax.random.normal(ks[4], (C,), dtype=jnp.float32)
    bn1 = dict(gamma=1.0 + 0.1 * jax.random.normal(ks[5], (C,), dtype=jnp.float32),
               beta=0.1 * jax.random.normal(ks[6], (C,), dtype=jnp.float32),
               mean=0.1 * jax.random.normal(ks[7], (C,), dtype=jnp.float32),
               var=0.5 + jax.random.uniform(ks[8], (C,), dtype=jnp.float32))
    bn2 = dict(gamma=1.0 + 0.1 * jax.random.normal(ks[9], (C,), dtype=jnp.float32),
               beta=0.1 * jax.random.normal(ks[10], (C,), dtype=jnp.float32),
               mean=0.1 * jax.random.normal(ks[11], (C,), dtype=jnp.float32),
               var=0.5 + jax.random.uniform(ks[12], (C,), dtype=jnp.float32))

    y = basic_block_forward(x, w1, b1, bn1, w2, b2, bn2)
    y = jax.block_until_ready(y)

    y_ref = _ref_basic_block(x, w1, b1, bn1, w2, b2, bn2)
    assert y.shape == x.shape and y.dtype == x.dtype
    np.testing.assert_allclose(np.asarray(y), np.asarray(y_ref), rtol=2e-2, atol=2e-2)

    print("KERNEL_OK")
</pallas_src>

<mosaic_0001>
module attributes {stable_mosaic.version = 11 : i64} {
  func.func @_basic_block_kernel(%arg0: i32, %arg1: memref<1x4x256xf32, #tpu.memory_space<vmem>>, %arg2: memref<4x36xf32, #tpu.memory_space<vmem>>, %arg3: memref<4x36xf32, #tpu.memory_space<vmem>>, %arg4: memref<4x1xf32, #tpu.memory_space<vmem>>, %arg5: memref<4x1xf32, #tpu.memory_space<vmem>>, %arg6: memref<4x1xf32, #tpu.memory_space<vmem>>, %arg7: memref<4x1xf32, #tpu.memory_space<vmem>>, %arg8: memref<1x256xf32, #tpu.memory_space<vmem>>, %arg9: memref<1x256xf32, #tpu.memory_space<vmem>>, %arg10: memref<1x4x256xf32, #tpu.memory_space<vmem>>, %arg11: memref<4x512xf32, #tpu.memory_space<vmem>>, %arg12: memref<36x256xf32, #tpu.memory_space<vmem>>) attributes {dimension_semantics = [#tpu.dimension_semantics<parallel>], iteration_bounds = array<i64: 2>, scalar_prefetch = 0 : i64, scratch_operands = 2 : i64, tpu.core_type = #tpu.core_type<tc>, window_params = [{transform_indices = @transform_0, window_bounds = array<i64: 1, 4, 256>}, {pipeline_mode = #tpu.pipeline_mode<synchronous>, transform_indices = @transform_1, window_bounds = array<i64: 4, 36>}, {pipeline_mode = #tpu.pipeline_mode<synchronous>, transform_indices = @transform_2, window_bounds = array<i64: 4, 36>}, {pipeline_mode = #tpu.pipeline_mode<synchronous>, transform_indices = @transform_3, window_bounds = array<i64: 4, 1>}, {pipeline_mode = #tpu.pipeline_mode<synchronous>, transform_indices = @transform_4, window_bounds = array<i64: 4, 1>}, {pipeline_mode = #tpu.pipeline_mode<synchronous>, transform_indices = @transform_5, window_bounds = array<i64: 4, 1>}, {pipeline_mode = #tpu.pipeline_mode<synchronous>, transform_indices = @transform_6, window_bounds = array<i64: 4, 1>}, {pipeline_mode = #tpu.pipeline_mode<synchronous>, transform_indices = @transform_7, window_bounds = array<i64: 1, 256>}, {pipeline_mode = #tpu.pipeline_mode<synchronous>, transform_indices = @transform_8, window_bounds = array<i64: 1, 256>}, {transform_indices = @transform_9, window_bounds = array<i64: 1, 4, 256>}]} {
    %c0 = arith.constant 0 : index
    %c0_0 = arith.constant 0 : index
    %0 = vector.load %arg8[%c0, %c0_0] : memref<1x256xf32, #tpu.memory_space<vmem>>, vector<1x256xf32>
    %c0_1 = arith.constant 0 : index
    %c0_2 = arith.constant 0 : index
    %1 = vector.load %arg9[%c0_1, %c0_2] : memref<1x256xf32, #tpu.memory_space<vmem>>, vector<1x256xf32>
    %cst = arith.constant 0.000000e+00 : f32
    %2 = vector.broadcast %cst : f32 to vector<4x512xf32>
    %c0_3 = arith.constant 0 : index
    %c0_4 = arith.constant 0 : index
    %3 = vector.load %arg11[%c0_3, %c0_4] : memref<4x512xf32, #tpu.memory_space<vmem>>, vector<4x512xf32>
    tpu.vector_store %arg11[%c0_3, %c0_4], %2 {strides = array<i32>} : memref<4x512xf32, #tpu.memory_space<vmem>>, vector<4x512xf32>,
    %c0_5 = arith.constant 0 : index
    %c0_6 = arith.constant 0 : index
    %c0_7 = arith.constant 0 : index
    %4 = vector.load %arg1[%c0_5, %c0_6, %c0_7] : memref<1x4x256xf32, #tpu.memory_space<vmem>>, vector<1x4x256xf32>
    %5 = vector.shape_cast %4 : vector<1x4x256xf32> to vector<4x256xf32>
    %c0_8 = arith.constant 0 : index
    %c128 = arith.constant 128 : index
    %6 = vector.load %arg11[%c0_8, %c128] : memref<4x512xf32, #tpu.memory_space<vmem>>, vector<4x256xf32>
    tpu.vector_store %arg11[%c0_8, %c128], %5 {strides = array<i32>} : memref<4x512xf32, #tpu.memory_space<vmem>>, vector<4x256xf32>,
    %c0_9 = arith.constant 0 : index
    %c111 = arith.constant 111 : index
    %7 = vector.load %arg11[%c0_9, %c111] : memref<4x512xf32, #tpu.memory_space<vmem>>, vector<4x256xf32>
    %8 = vector.broadcast %0 : vector<1x256xf32> to vector<4x256xf32>
    %9 = arith.mulf %7, %8 : vector<4x256xf32>
    %c0_10 = arith.constant 0 : index
    %c0_11 = arith.constant 0 : index
    %10 = vector.load %arg12[%c0_10, %c0_11] : memref<36x256xf32, #tpu.memory_space<vmem>>, vector<4x256xf32>
    tpu.vector_store %arg12[%c0_10, %c0_11], %9 {strides = array<i32>} : memref<36x256xf32, #tpu.memory_space<vmem>>, vector<4x256xf32>,
    %c0_12 = arith.constant 0 : index
    %c112 = arith.constant 112 : index
    %11 = vector.load %arg11[%c0_12, %c112] : memref<4x512xf32, #tpu.memory_space<vmem>>, vector<4x256xf32>
    %c4 = arith.constant 4 : index
    %c0_13 = arith.constant 0 : index
    %12 = vector.load %arg12[%c4, %c0_13] : memref<36x256xf32, #tpu.memory_space<vmem>>, vector<4x256xf32>
    tpu.vector_store %arg12[%c4, %c0_13], %11 {strides = array<i32>} : memref<36x256xf32, #tpu.memory_space<vmem>>, vector<4x256xf32>,
    %c0_14 = arith.constant 0 : index
    %c113 = arith.constant 113 : index
    %13 = vector.load %arg11[%c0_14, %c113] : memref<4x512xf32, #tpu.memory_space<vmem>>, vector<4x256xf32>
    %14 = vector.broadcast %1 : vector<1x256xf32> to vector<4x256xf32>
    %15 = arith.mulf %13, %14 : vector<4x256xf32>
    %c8 = arith.constant 8 : index
    %c0_15 = arith.constant 0 : index
    %16 = vector.load %arg12[%c8, %c0_15] : memref<36x256xf32, #tpu.memory_space<vmem>>, vector<4x256xf32>
    tpu.vector_store %arg12[%c8, %c0_15], %15 {strides = array<i32>} : memref<36x256xf32, #tpu.memory_space<vmem>>, vector<4x256xf32>,
    %c0_16 = arith.constant 0 : index
    %c127 = arith.constant 127 : index
    %17 = vector.load %arg11[%c0_16, %c127] : memref<4x512xf32, #tpu.memory_space<vmem>>, vector<4x256xf32>
    %18 = vector.broadcast %0 : vector<1x256xf32> to vector<4x256xf32>
    %19 = arith.mulf %17, %18 : vector<4x256xf32>
    %c12 = arith.constant 12 : index
    %c0_17 = arith.constant 0 : index
    %20 = vector.load %arg12[%c12, %c0_17] : memref<36x256xf32, #tpu.memory_space<vmem>>, vector<4x256xf32>
    tpu.vector_store %arg12[%c12, %c0_17], %19 {strides = array<i32>} : memref<36x256xf32, #tpu.memory_space<vmem>>, vector<4x256xf32>,
    %c0_18 = arith.constant 0 : index
    %c128_19 = arith.constant 128 : index
    %21 = vector.load %arg11[%c0_18, %c128_19] : memref<4x512xf32, #tpu.memory_space<vmem>>, vector<4x256xf32>
    %c16 = arith.constant 16 : index
    %c0_20 = arith.constant 0 : index
    %22 = vector.load %arg12[%c16, %c0_20] : memref<36x256xf32, #tpu.memory_space<vmem>>, vector<4x256xf32>
    tpu.vector_store %arg12[%c16, %c0_20], %21 {strides = array<i32>} : memref<36x256xf32, #tpu.memory_space<vmem>>, vector<4x256xf32>,
    %c0_21 = arith.constant 0 : index
    %c129 = arith.constant 129 : index
    %23 = vector.load %arg11[%c0_21, %c129] : memref<4x512xf32, #tpu.memory_space<vmem>>, vector<4x256xf32>
    %24 = vector.broadcast %1 : vector<1x256xf32> to vector<4x256xf32>
    %25 = arith.mulf %23, %24 : vector<4x256xf32>
    %c20 = arith.constant 20 : index
    %c0_22 = arith.constant 0 : index
    %26 = vector.load %arg12[%c20, %c0_22] : memref<36x256xf32, #tpu.memory_space<vmem>>, vector<4x256xf32>
    tpu.vector_store %arg12[%c20, %c0_22], %25 {strides = array<i32>} : memref<36x256xf32, #tpu.memory_space<vmem>>, vector<4x256xf32>,
    %c0_23 = arith.constant 0 : index
    %c143 = arith.constant 143 : index
    %27 = vector.load %arg11[%c0_23, %c143] : memref<4x512xf32, #tpu.memory_space<vmem>>, vector<4x256xf32>
    %28 = vector.broadcast %0 : vector<1x256xf32> to vector<4x256xf32>
    %29 = arith.mulf %27, %28 : vector<4x256xf32>
    %c24 = arith.constant 24 : index
    %c0_24 = arith.constant 0 : index
    %30 = vector.load %arg12[%c24, %c0_24] : memref<36x256xf32, #tpu.memory_space<vmem>>, vector<4x256xf32>
    tpu.vector_store %arg12[%c24, %c0_24], %29 {strides = array<i32>} : memref<36x256xf32, #tpu.memory_space<vmem>>, vector<4x256xf32>,
    %c0_25 = arith.constant 0 : index
    %c144 = arith.constant 144 : index
    %31 = vector.load %arg11[%c0_25, %c144] : memref<4x512xf32, #tpu.memory_space<vmem>>, vector<4x256xf32>
    %c28 = arith.constant 28 : index
    %c0_26 = arith.constant 0 : index
    %32 = vector.load %arg12[%c28, %c0_26] : memref<36x256xf32, #tpu.memory_space<vmem>>, vector<4x256xf32>
    tpu.vector_store %arg12[%c28, %c0_26], %31 {strides = array<i32>} : memref<36x256xf32, #tpu.memory_space<vmem>>, vector<4x256xf32>,
    %c0_27 = arith.constant 0 : index
    %c145 = arith.constant 145 : index
    %33 = vector.load %arg11[%c0_27, %c145] : memref<4x512xf32, #tpu.memory_space<vmem>>, vector<4x256xf32>
    %34 = vector.broadcast %1 : vector<1x256xf32> to vector<4x256xf32>
    %35 = arith.mulf %33, %34 : vector<4x256xf32>
    %c32 = arith.constant 32 : index
    %c0_28 = arith.constant 0 : index
    %36 = vector.load %arg12[%c32, %c0_28] : memref<36x256xf32, #tpu.memory_space<vmem>>, vector<4x256xf32>
    tpu.vector_store %arg12[%c32, %c0_28], %35 {strides = array<i32>} : memref<36x256xf32, #tpu.memory_space<vmem>>, vector<4x256xf32>,
    %c0_29 = arith.constant 0 : index
    %c0_30 = arith.constant 0 : index
    %37 = vector.load %arg2[%c0_29, %c0_30] : memref<4x36xf32, #tpu.memory_space<vmem>>, vector<4x36xf32>
    %c0_31 = arith.constant 0 : index
    %c0_32 = arith.constant 0 : index
    %38 = vector.load %arg12[%c0_31, %c0_32] : memref<36x256xf32, #tpu.memory_space<vmem>>, vector<36x256xf32>
    %cst_33 = arith.constant dense<0.000000e+00> : vector<4x256xf32>
    %39 = tpu.matmul %37, %38, %cst_33 {dimension_numbers = #tpu.dot_dimension_numbers<[1], [0], [0], [1], [0, 0, 1, 1], [], []>} : vector<4x36xf32>, vector<36x256xf32>, vector<4x256xf32> -> vector<4x256xf32>
    %c0_34 = arith.constant 0 : index
    %c0_35 = arith.constant 0 : index
    %40 = vector.load %arg4[%c0_34, %c0_35] : memref<4x1xf32, #tpu.memory_space<vmem>>, vector<4x1xf32>
    %41 = vector.broadcast %40 : vector<4x1xf32> to vector<4x256xf32>
    %42 = arith.mulf %39, %41 : vector<4x256xf32>
    %c0_36 = arith.constant 0 : index
    %c0_37 = arith.constant 0 : index
    %43 = vector.load %arg5[%c0_36, %c0_37] : memref<4x1xf32, #tpu.memory_space<vmem>>, vector<4x1xf32>
    %44 = vector.broadcast %43 : vector<4x1xf32> to vector<4x256xf32>
    %45 = arith.addf %42, %44 : vector<4x256xf32>
    %cst_38 = arith.constant 0.000000e+00 : f32
    %46 = vector.broadcast %cst_38 : f32 to vector<4x256xf32>
    %47 = arith.maximumf %45, %46 : vector<4x256xf32>
    %c0_39 = arith.constant 0 : index
    %c128_40 = arith.constant 128 : index
    %48 = vector.load %arg11[%c0_39, %c128_40] : memref<4x512xf32, #tpu.memory_space<vmem>>, vector<4x256xf32>
    tpu.vector_store %arg11[%c0_39, %c128_40], %47 {strides = array<i32>} : memref<4x512xf32, #tpu.memory_space<vmem>>, vector<4x256xf32>,
    %c0_41 = arith.constant 0 : index
    %c111_42 = arith.constant 111 : index
    %49 = vector.load %arg11[%c0_41, %c111_42] : memref<4x512xf32, #tpu.memory_space<vmem>>, vector<4x256xf32>
    %50 = vector.broadcast %0 : vector<1x256xf32> to vector<4x256xf32>
    %51 = arith.mulf %49, %50 : vector<4x256xf32>
    %c0_43 = arith.constant 0 : index
    %c0_44 = arith.constant 0 : index
    %52 = vector.load %arg12[%c0_43, %c0_44] : memref<36x256xf32, #tpu.memory_space<vmem>>, vector<4x256xf32>
    tpu.vector_store %arg12[%c0_43, %c0_44], %51 {strides = array<i32>} : memref<36x256xf32, #tpu.memory_space<vmem>>, vector<4x256xf32>,
    %c0_45 = arith.constant 0 : index
    %c112_46 = arith.constant 112 : index
    %53 = vector.load %arg11[%c0_45, %c112_46] : memref<4x512xf32, #tpu.memory_space<vmem>>, vector<4x256xf32>
    %c4_47 = arith.constant 4 : index
    %c0_48 = arith.constant 0 : index
    %54 = vector.load %arg12[%c4_47, %c0_48] : memref<36x256xf32, #tpu.memory_space<vmem>>, vector<4x256xf32>
    tpu.vector_store %arg12[%c4_47, %c0_48], %53 {strides = array<i32>} : memref<36x256xf32, #tpu.memory_space<vmem>>, vector<4x256xf32>,
    %c0_49 = arith.constant 0 : index
    %c113_50 = arith.constant 113 : index
    %55 = vector.load %arg11[%c0_49, %c113_50] : memref<4x512xf32, #tpu.memory_space<vmem>>, vector<4x256xf32>
    %56 = vector.broadcast %1 : vector<1x256xf32> to vector<4x256xf32>
    %57 = arith.mulf %55, %56 : vector<4x256xf32>
    %c8_51 = arith.constant 8 : index
    %c0_52 = arith.constant 0 : index
    %58 = vector.load %arg12[%c8_51, %c0_52] : memref<36x256xf32, #tpu.memory_space<vmem>>, vector<4x256xf32>
    tpu.vector_store %arg12[%c8_51, %c0_52], %57 {strides = array<i32>} : memref<36x256xf32, #tpu.memory_space<vmem>>, vector<4x256xf32>,
    %c0_53 = arith.constant 0 : index
    %c127_54 = arith.constant 127 : index
    %59 = vector.load %arg11[%c0_53, %c127_54] : memref<4x512xf32, #tpu.memory_space<vmem>>, vector<4x256xf32>
    %60 = vector.broadcast %0 : vector<1x256xf32> to vector<4x256xf32>
    %61 = arith.mulf %59, %60 : vector<4x256xf32>
    %c12_55 = arith.constant 12 : index
    %c0_56 = arith.constant 0 : index
    %62 = vector.load %arg12[%c12_55, %c0_56] : memref<36x256xf32, #tpu.memory_space<vmem>>, vector<4x256xf32>
    tpu.vector_store %arg12[%c12_55, %c0_56], %61 {strides = array<i32>} : memref<36x256xf32, #tpu.memory_space<vmem>>, vector<4x256xf32>,
    %c0_57 = arith.constant 0 : index
    %c128_58 = arith.constant 128 : index
    %63 = vector.load %arg11[%c0_57, %c128_58] : memref<4x512xf32, #tpu.memory_space<vmem>>, vector<4x256xf32>
    %c16_59 = arith.constant 16 : index
    %c0_60 = arith.constant 0 : index
    %64 = vector.load %arg12[%c16_59, %c0_60] : memref<36x256xf32, #tpu.memory_space<vmem>>, vector<4x256xf32>
    tpu.vector_store %arg12[%c16_59, %c0_60], %63 {strides = array<i32>} : memref<36x256xf32, #tpu.memory_space<vmem>>, vector<4x256xf32>,
    %c0_61 = arith.constant 0 : index
    %c129_62 = arith.constant 129 : index
    %65 = vector.load %arg11[%c0_61, %c129_62] : memref<4x512xf32, #tpu.memory_space<vmem>>, vector<4x256xf32>
    %66 = vector.broadcast %1 : vector<1x256xf32> to vector<4x256xf32>
    %67 = arith.mulf %65, %66 : vector<4x256xf32>
    %c20_63 = arith.constant 20 : index
    %c0_64 = arith.constant 0 : index
    %68 = vector.load %arg12[%c20_63, %c0_64] : memref<36x256xf32, #tpu.memory_space<vmem>>, vector<4x256xf32>
    tpu.vector_store %arg12[%c20_63, %c0_64], %67 {strides = array<i32>} : memref<36x256xf32, #tpu.memory_space<vmem>>, vector<4x256xf32>,
    %c0_65 = arith.constant 0 : index
    %c143_66 = arith.constant 143 : index
    %69 = vector.load %arg11[%c0_65, %c143_66] : memref<4x512xf32, #tpu.memory_space<vmem>>, vector<4x256xf32>
    %70 = vector.broadcast %0 : vector<1x256xf32> to vector<4x256xf32>
    %71 = arith.mulf %69, %70 : vector<4x256xf32>
    %c24_67 = arith.constant 24 : index
    %c0_68 = arith.constant 0 : index
    %72 = vector.load %arg12[%c24_67, %c0_68] : memref<36x256xf32, #tpu.memory_space<vmem>>, vector<4x256xf32>
    tpu.vector_store %arg12[%c24_67, %c0_68], %71 {strides = array<i32>} : memref<36x256xf32, #tpu.memory_space<vmem>>, vector<4x256xf32>,
    %c0_69 = arith.constant 0 : index
    %c144_70 = arith.constant 144 : index
    %73 = vector.load %arg11[%c0_69, %c144_70] : memref<4x512xf32, #tpu.memory_space<vmem>>, vector<4x256xf32>
    %c28_71 = arith.constant 28 : index
    %c0_72 = arith.constant 0 : index
    %74 = vector.load %arg12[%c28_71, %c0_72] : memref<36x256xf32, #tpu.memory_space<vmem>>, vector<4x256xf32>
    tpu.vector_store %arg12[%c28_71, %c0_72], %73 {strides = array<i32>} : memref<36x256xf32, #tpu.memory_space<vmem>>, vector<4x256xf32>,
    %c0_73 = arith.constant 0 : index
    %c145_74 = arith.constant 145 : index
    %75 = vector.load %arg11[%c0_73, %c145_74] : memref<4x512xf32, #tpu.memory_space<vmem>>, vector<4x256xf32>
    %76 = vector.broadcast %1 : vector<1x256xf32> to vector<4x256xf32>
    %77 = arith.mulf %75, %76 : vector<4x256xf32>
    %c32_75 = arith.constant 32 : index
    %c0_76 = arith.constant 0 : index
    %78 = vector.load %arg12[%c32_75, %c0_76] : memref<36x256xf32, #tpu.memory_space<vmem>>, vector<4x256xf32>
    tpu.vector_store %arg12[%c32_75, %c0_76], %77 {strides = array<i32>} : memref<36x256xf32, #tpu.memory_space<vmem>>, vector<4x256xf32>,
    %c0_77 = arith.constant 0 : index
    %c0_78 = arith.constant 0 : index
    %79 = vector.load %arg3[%c0_77, %c0_78] : memref<4x36xf32, #tpu.memory_space<vmem>>, vector<4x36xf32>
    %c0_79 = arith.constant 0 : index
    %c0_80 = arith.constant 0 : index
    %80 = vector.load %arg12[%c0_79, %c0_80] : memref<36x256xf32, #tpu.memory_space<vmem>>, vector<36x256xf32>
    %cst_81 = arith.constant dense<0.000000e+00> : vector<4x256xf32>
    %81 = tpu.matmul %79, %80, %cst_81 {dimension_numbers = #tpu.dot_dimension_numbers<[1], [0], [0], [1], [0, 0, 1, 1], [], []>} : vector<4x36xf32>, vector<36x256xf32>, vector<4x256xf32> -> vector<4x256xf32>
    %c0_82 = arith.constant 0 : index
    %c0_83 = arith.constant 0 : index
    %82 = vector.load %arg6[%c0_82, %c0_83] : memref<4x1xf32, #tpu.memory_space<vmem>>, vector<4x1xf32>
    %83 = vector.broadcast %82 : vector<4x1xf32> to vector<4x256xf32>
    %84 = arith.mulf %81, %83 : vector<4x256xf32>
    %c0_84 = arith.constant 0 : index
    %c0_85 = arith.constant 0 : index
    %85 = vector.load %arg7[%c0_84, %c0_85] : memref<4x1xf32, #tpu.memory_space<vmem>>, vector<4x1xf32>
    %86 = vector.broadcast %85 : vector<4x1xf32> to vector<4x256xf32>
    %87 = arith.addf %84, %86 : vector<4x256xf32>
    %88 = arith.addf %87, %5 : vector<4x256xf32>
    %cst_86 = arith.constant 0.000000e+00 : f32
    %89 = vector.broadcast %cst_86 : f32 to vector<4x256xf32>
    %90 = arith.maximumf %88, %89 : vector<4x256xf32>
    %c0_87 = arith.constant 0 : index
    %c0_88 = arith.constant 0 : index
    %c0_89 = arith.constant 0 : index
    %91 = vector.load %arg10[%c0_87, %c0_88, %c0_89] : memref<1x4x256xf32, #tpu.memory_space<vmem>>, vector<1x4x256xf32>
    %92 = vector.shape_cast %91 : vector<1x4x256xf32> to vector<4x256xf32>
    %93 = vector.shape_cast %90 : vector<4x256xf32> to vector<1x4x256xf32>
    tpu.vector_store %arg10[%c0_87, %c0_88, %c0_89], %93 {strides = array<i32>} : memref<1x4x256xf32, #tpu.memory_space<vmem>>, vector<1x4x256xf32>,
    return
  }
  func.func @transform_0(%arg0: i32) -> (i32, i32, i32) {
    %c0_i32 = arith.constant 0 : i32
    %c0_i32_0 = arith.constant 0 : i32
    %c0_i32_1 = arith.constant 0 : i32
    return %arg0, %c0_i32, %c0_i32_0 : i32, i32, i32
  }
  func.func @transform_1(%arg0: i32) -> (i32, i32) {
    %c0_i32 = arith.constant 0 : i32
    %c0_i32_0 = arith.constant 0 : i32
    %c0_i32_1 = arith.constant 0 : i32
    return %c0_i32, %c0_i32_0 : i32, i32
  }
  func.func @transform_2(%arg0: i32) -> (i32, i32) {
    %c0_i32 = arith.constant 0 : i32
    %c0_i32_0 = arith.constant 0 : i32
    %c0_i32_1 = arith.constant 0 : i32
    return %c0_i32, %c0_i32_0 : i32, i32
  }
  func.func @transform_3(%arg0: i32) -> (i32, i32) {
    %c0_i32 = arith.constant 0 : i32
    %c0_i32_0 = arith.constant 0 : i32
    %c0_i32_1 = arith.constant 0 : i32
    return %c0_i32, %c0_i32_0 : i32, i32
  }
  func.func @transform_4(%arg0: i32) -> (i32, i32) {
    %c0_i32 = arith.constant 0 : i32
    %c0_i32_0 = arith.constant 0 : i32
    %c0_i32_1 = arith.constant 0 : i32
    return %c0_i32, %c0_i32_0 : i32, i32
  }
  func.func @transform_5(%arg0: i32) -> (i32, i32) {
    %c0_i32 = arith.constant 0 : i32
    %c0_i32_0 = arith.constant 0 : i32
    %c0_i32_1 = arith.constant 0 : i32
    return %c0_i32, %c0_i32_0 : i32, i32
  }
  func.func @transform_6(%arg0: i32) -> (i32, i32) {
    %c0_i32 = arith.constant 0 : i32
    %c0_i32_0 = arith.constant 0 : i32
    %c0_i32_1 = arith.constant 0 : i32
    return %c0_i32, %c0_i32_0 : i32, i32
  }
  func.func @transform_7(%arg0: i32) -> (i32, i32) {
    %c0_i32 = arith.constant 0 : i32
    %c0_i32_0 = arith.constant 0 : i32
    %c0_i32_1 = arith.constant 0 : i32
    return %c0_i32, %c0_i32_0 : i32, i32
  }
  func.func @transform_8(%arg0: i32) -> (i32, i32) {
    %c0_i32 = arith.constant 0 : i32
    %c0_i32_0 = arith.constant 0 : i32
    %c0_i32_1 = arith.constant 0 : i32
    return %c0_i32, %c0_i32_0 : i32, i32
  }
  func.func @transform_9(%arg0: i32) -> (i32, i32, i32) {
    %c0_i32 = arith.constant 0 : i32
    %c0_i32_0 = arith.constant 0 : i32
    %c0_i32_1 = arith.constant 0 : i32
    return %arg0, %c0_i32, %c0_i32_0 : i32, i32, i32
  }
}

</mosaic_0001>

<llo_original>
// kernel: tpu_custom_call.1
$region0: #{tpu_custom_call.1}
  #allocation0 [shape = 'u32[]', space=smem, size = 0x4, offset = 0x4, fixed_abs, tag = 'smem constant byte address 0x4 - core index']
  #allocation1 [shape = 'u32[144,128]{1,0:T(1,128)}', space=vmem, size = 0x12000, scoped, tag = 'internal scratch']
  #allocation2 [shape = 'f32[4,512]{1,0:T(4,128)}', space=vmem, size = 0x2000, scoped, tag = 'scratch operand']
  #allocation3 [shape = 'f32[36,256]{1,0:T(8,128)}', space=vmem, size = 0xa000, scoped, tag = 'scratch operand']
  %s0 = inlined_call_operand.vmem [shape: f32[2,4,256], index: 0, kind: input, shape index: {}]
  %s1 = inlined_call_operand.vmem [shape: f32[4,36], index: 1, kind: input, shape index: {}]
  %s2 = inlined_call_operand.vmem [shape: f32[4,36], index: 2, kind: input, shape index: {}]
  %s3 = inlined_call_operand.vmem [shape: f32[4,1], index: 3, kind: input, shape index: {}]
  %s4 = inlined_call_operand.vmem [shape: f32[4,1], index: 4, kind: input, shape index: {}]
  %s5 = inlined_call_operand.vmem [shape: f32[4,1], index: 5, kind: input, shape index: {}]
  %s6 = inlined_call_operand.vmem [shape: f32[4,1], index: 6, kind: input, shape index: {}]
  %s7 = inlined_call_operand.vmem [shape: f32[1,256], index: 7, kind: input, shape index: {}]
  %s8 = inlined_call_operand.vmem [shape: f32[1,256], index: 8, kind: input, shape index: {}]
  %s9 = inlined_call_operand.hbm [shape: f32[2,4,256], index: 9, kind: output, shape index: {}]
  %s10 = sld [smem:[#allocation0]]
  $region69: #{tpu_custom_call.1} parent=0
    _
  %s12 = ssub.s32 1, %s10
  %s13 = scalar_select 0, %s12, %s10
  $region1: #{tpu_custom_call.1} parent=0
    #allocation4 [shape = 'u8[8192]{0}', space=vmem, size = 0x2000, scoped, tag = 'output window, operand 0']
    #allocation5 [shape = 's32[2]{0}', space=sflag, size = 0x8, scoped, tag = 'scoped memory for tpu_custom_call.1']
    %14 = vsyncpa [#allocation5], 0
    %s15 = scalar_lea.sflag [#allocation5], 1
    %16 = vsyncpa %s15, 0
    loop: start=0, step=1, limit=4
    $region2: #{tpu_custom_call.1} parent=1 // loop_pre_header
      _
    $region3: #{tpu_custom_call.1} parent=1 // loop_header
      %s18 = sphi 0, %s22
      %p19 = scmp.ge.s32.totalorder %s18, 4
      %s28 = sphi 0, %s30
      %s31 = sphi 0, %s28
      %s32 = sphi 0, %s31
      %s48 = sphi 0, %s32
      %s52 = sphi 0, %s52
      %s54 = sphi 0, %s52
      %s55 = sphi 0, %s54
      %s69 = sphi 0, %s55
      %s73 = sphi 0, %s73
      %s75 = sphi 0, %s73
      %s76 = sphi 0, %s75
      %s90 = sphi 0, %s76
      %s94 = sphi 0, %s94
      %s96 = sphi 0, %s94
      %s97 = sphi 0, %s96
      %s111 = sphi 0, %s97
      %s115 = sphi 0, %s115
      %s117 = sphi 0, %s115
      %s118 = sphi 0, %s117
      %s132 = sphi 0, %s118
      %s136 = sphi 0, %s136
      %s138 = sphi 0, %s136
      %s139 = sphi 0, %s138
      %s153 = sphi 0, %s139
      %s157 = sphi 0, %s157
      %s159 = sphi 0, %s157
      %s160 = sphi 0, %s159
      %s174 = sphi 0, %s160
      %s178 = sphi 0, %s178
      %s180 = sphi 0, %s178
      %s181 = sphi 0, %s180
      %s195 = sphi 0, %s181
      %s199 = sphi 0, %s199
      %s201 = sphi 0, %s199
      %s202 = sphi 0, %s201
      %s216 = sphi 0, %s202
      %s222 = sphi 0, %s224
      %s225 = sphi 0, %s222
      %s226 = sphi 0, %s225
      %s242 = sphi 0, %s226
    $region4: #{tpu_custom_call.1} parent=1 // loop_header_branch
      %21 = sbr.rel (%p19) target = $region8
    $region5: #{tpu_custom_call.1} parent=1 // loop_body
      %s23 = ssub.s32 %s18, 1
      %s24 = ssub.s32 %s18, 2
      %s25 = sadd.s32 %s18, 1
      %s26 = ssub.s32 %s18, %s25
      %p27 = scmp.eq.s32.totalorder %s26, 0
      %s29 = sadd.s32 %s28, 1
      %s30 = scalar_select %p27, %s28, %s29
      %p33 = pneg %p27
      %p34 = scmp.eq.s32.totalorder %s18, 1
      %p35 = por %p33, %p34
      %p36 = scmp.ne.s32.totalorder %s28, %s31
      %p37 = scmp.eq.s32.totalorder %s18, 0
      %p38 = por %p36, %p37
      %p39 = scmp.ne.s32.totalorder %s28, %s31
      %p40 = scmp.eq.s32.totalorder %s23, 1
      %p41 = por %p39, %p40
      %p42 = scmp.ne.s32.totalorder %s31, %s32
      %p43 = scmp.eq.s32.totalorder %s23, 0
      %p44 = por %p42, %p43
      %p45 = scmp.ne.s32.totalorder %s31, %s32
      %p46 = scmp.eq.s32.totalorder %s24, 1
      %p47 = por %p45, %p46
      %p49 = scmp.ne.s32.totalorder %s32, %s48
      %p50 = scmp.eq.s32.totalorder %s24, 0
      %p51 = por %p49, %p50
      %s53 = sadd.s32 %s52, 1
      %p56 = scmp.eq.s32.totalorder %s18, 1
      %p57 = scmp.ne.s32.totalorder %s52, %s54
      %p58 = scmp.eq.s32.totalorder %s18, 0
      %p59 = por %p57, %p58
      %p60 = scmp.ne.s32.totalorder %s52, %s54
      %p61 = scmp.eq.s32.totalorder %s23, 1
      %p62 = por %p60, %p61
      %p63 = scmp.ne.s32.totalorder %s54, %s55
      %p64 = scmp.eq.s32.totalorder %s23, 0
      %p65 = por %p63, %p64
      %p66 = scmp.ne.s32.totalorder %s54, %s55
      %p67 = scmp.eq.s32.totalorder %s24, 1
      %p68 = por %p66, %p67
      %p70 = scmp.ne.s32.totalorder %s55, %s69
      %p71 = scmp.eq.s32.totalorder %s24, 0
      %p72 = por %p70, %p71
      %s74 = sadd.s32 %s73, 1
      %p77 = scmp.eq.s32.totalorder %s18, 1
      %p78 = scmp.ne.s32.totalorder %s73, %s75
      %p79 = scmp.eq.s32.totalorder %s18, 0
      %p80 = por %p78, %p79
      %p81 = scmp.ne.s32.totalorder %s73, %s75
      %p82 = scmp.eq.s32.totalorder %s23, 1
      %p83 = por %p81, %p82
      %p84 = scmp.ne.s32.totalorder %s75, %s76
      %p85 = scmp.eq.s32.totalorder %s23, 0
      %p86 = por %p84, %p85
      %p87 = scmp.ne.s32.totalorder %s75, %s76
      %p88 = scmp.eq.s32.totalorder %s24, 1
      %p89 = por %p87, %p88
      %p91 = scmp.ne.s32.totalorder %s76, %s90
      %p92 = scmp.eq.s32.totalorder %s24, 0
      %p93 = por %p91, %p92
      %s95 = sadd.s32 %s94, 1
      %p98 = scmp.eq.s32.totalorder %s18, 1
      %p99 = scmp.ne.s32.totalorder %s94, %s96
      %p100 = scmp.eq.s32.totalorder %s18, 0
      %p101 = por %p99, %p100
      %p102 = scmp.ne.s32.totalorder %s94, %s96
      %p103 = scmp.eq.s32.totalorder %s23, 1
      %p104 = por %p102, %p103
      %p105 = scmp.ne.s32.totalorder %s96, %s97
      %p106 = scmp.eq.s32.totalorder %s23, 0
      %p107 = por %p105, %p106
      %p108 = scmp.ne.s32.totalorder %s96, %s97
      %p109 = scmp.eq.s32.totalorder %s24, 1
      %p110 = por %p108, %p109
      %p112 = scmp.ne.s32.totalorder %s97, %s111
      %p113 = scmp.eq.s32.totalorder %s24, 0
      %p114 = por %p112, %p113
      %s116 = sadd.s32 %s115, 1
      %p119 = scmp.eq.s32.totalorder %s18, 1
      %p120 = scmp.ne.s32.totalorder %s115, %s117
      %p121 = scmp.eq.s32.totalorder %s18, 0
      %p122 = por %p120, %p121
      %p123 = scmp.ne.s32.totalorder %s115, %s117
      %p124 = scmp.eq.s32.totalorder %s23, 1
      %p125 = por %p123, %p124
      %p126 = scmp.ne.s32.totalorder %s117, %s118
      %p127 = scmp.eq.s32.totalorder %s23, 0
      %p128 = por %p126, %p127
      %p129 = scmp.ne.s32.totalorder %s117, %s118
      %p130 = scmp.eq.s32.totalorder %s24, 1
      %p131 = por %p129, %p130
      %p133 = scmp.ne.s32.totalorder %s118, %s132
      %p134 = scmp.eq.s32.totalorder %s24, 0
      %p135 = por %p133, %p134
      %s137 = sadd.s32 %s136, 1
      %p140 = scmp.eq.s32.totalorder %s18, 1
      %p141 = scmp.ne.s32.totalorder %s136, %s138
      %p142 = scmp.eq.s32.totalorder %s18, 0
      %p143 = por %p141, %p142
      %p144 = scmp.ne.s32.totalorder %s136, %s138
      %p145 = scmp.eq.s32.totalorder %s23, 1
      %p146 = por %p144, %p145
      %p147 = scmp.ne.s32.totalorder %s138, %s139
      %p148 = scmp.eq.s32.totalorder %s23, 0
      %p149 = por %p147, %p148
      %p150 = scmp.ne.s32.totalorder %s138, %s139
      %p151 = scmp.eq.s32.totalorder %s24, 1
      %p152 = por %p150, %p151
      %p154 = scmp.ne.s32.totalorder %s139, %s153
      %p155 = scmp.eq.s32.totalorder %s24, 0
      %p156 = por %p154, %p155
      %s158 = sadd.s32 %s157, 1
      %p161 = scmp.eq.s32.totalorder %s18, 1
      %p162 = scmp.ne.s32.totalorder %s157, %s159
      %p163 = scmp.eq.s32.totalorder %s18, 0
      %p164 = por %p162, %p163
      %p165 = scmp.ne.s32.totalorder %s157, %s159
      %p166 = scmp.eq.s32.totalorder %s23, 1
      %p167 = por %p165, %p166
      %p168 = scmp.ne.s32.totalorder %s159, %s160
      %p169 = scmp.eq.s32.totalorder %s23, 0
      %p170 = por %p168, %p169
      %p171 = scmp.ne.s32.totalorder %s159, %s160
      %p172 = scmp.eq.s32.totalorder %s24, 1
      %p173 = por %p171, %p172
      %p175 = scmp.ne.s32.totalorder %s160, %s174
      %p176 = scmp.eq.s32.totalorder %s24, 0
      %p177 = por %p175, %p176
      %s179 = sadd.s32 %s178, 1
      %p182 = scmp.eq.s32.totalorder %s18, 1
      %p183 = scmp.ne.s32.totalorder %s178, %s180
      %p184 = scmp.eq.s32.totalorder %s18, 0
      %p185 = por %p183, %p184
      %p186 = scmp.ne.s32.totalorder %s178, %s180
      %p187 = scmp.eq.s32.totalorder %s23, 1
      %p188 = por %p186, %p187
      %p189 = scmp.ne.s32.totalorder %s180, %s181
      %p190 = scmp.eq.s32.totalorder %s23, 0
      %p191 = por %p189, %p190
      %p192 = scmp.ne.s32.totalorder %s180, %s181
      %p193 = scmp.eq.s32.totalorder %s24, 1
      %p194 = por %p192, %p193
      %p196 = scmp.ne.s32.totalorder %s181, %s195
      %p197 = scmp.eq.s32.totalorder %s24, 0
      %p198 = por %p196, %p197
      %s200 = sadd.s32 %s199, 1
      %p203 = scmp.eq.s32.totalorder %s18, 1
      %p204 = scmp.ne.s32.totalorder %s199, %s201
      %p205 = scmp.eq.s32.totalorder %s18, 0
      %p206 = por %p204, %p205
      %p207 = scmp.ne.s32.totalorder %s199, %s201
      %p208 = scmp.eq.s32.totalorder %s23, 1
      %p209 = por %p207, %p208
      %p210 = scmp.ne.s32.totalorder %s201, %s202
      %p211 = scmp.eq.s32.totalorder %s23, 0
      %p212 = por %p210, %p211
      %p213 = scmp.ne.s32.totalorder %s201, %s202
      %p214 = scmp.eq.s32.totalorder %s24, 1
      %p215 = por %p213, %p214
      %p217 = scmp.ne.s32.totalorder %s202, %s216
      %p218 = scmp.eq.s32.totalorder %s24, 0
      %p219 = por %p217, %p218
      %s220 = ssub.s32 %s18, %s25
      %p221 = scmp.eq.s32.totalorder %s220, 0
      %s223 = sadd.s32 %s222, 1
      %s224 = scalar_select %p221, %s222, %s223
      %p227 = pneg %p221
      %p228 = scmp.eq.s32.totalorder %s18, 1
      %p229 = por %p227, %p228
      %p230 = scmp.ne.s32.totalorder %s222, %s225
      %p231 = scmp.eq.s32.totalorder %s18, 0
      %p232 = por %p230, %p231
      %p233 = scmp.ne.s32.totalorder %s222, %s225
      %p234 = scmp.eq.s32.totalorder %s23, 1
      %p235 = por %p233, %p234
      %p236 = scmp.ne.s32.totalorder %s225, %s226
      %p237 = scmp.eq.s32.totalorder %s23, 0
      %p238 = por %p236, %p237
      %p239 = scmp.ne.s32.totalorder %s225, %s226
      %p240 = scmp.eq.s32.totalorder %s24, 1
      %p241 = por %p239, %p240
      %p243 = scmp.ne.s32.totalorder %s226, %s242
      %p244 = scmp.eq.s32.totalorder %s24, 0
      %p245 = por %p243, %p244
      %p246 = scmp.le.s32.totalorder 1, %s18
      %p247 = scmp.lt.s32.totalorder %s18, 3
      %p248 = pnand %p246, %p247
      %p249 = pneg %p248
      // Predicated region
      $region9: #{tpu_custom_call.1} parent=5 // pred_check
        _
      $region10: #{tpu_custom_call.1} parent=5 // pred_check_branch
        %251 = sbr.rel (%p248) target = $region12
      $region11: #{tpu_custom_call.1} parent=5 // pred_region
        %s252 = ssub.s32 %s18, 1
        // Predicated region
        $region13: #{tpu_custom_call.1} parent=11 // pred_check
          %p253 = pneg %p65
        $region14: #{tpu_custom_call.1} parent=11 // pred_check_branch
          %255 = sbr.rel (%p253) target = $region16
        $region15: #{tpu_custom_call.1} parent=11 // pred_region
          _
        $region16: #{tpu_custom_call.1} parent=11 // pred_fallthru
          _
        // Predicated region
        $region17: #{tpu_custom_call.1} parent=11 // pred_check
          %p256 = pneg %p86
        $region18: #{tpu_custom_call.1} parent=11 // pred_check_branch
          %258 = sbr.rel (%p256) target = $region20
        $region19: #{tpu_custom_call.1} parent=11 // pred_region
          _
        $region20: #{tpu_custom_call.1} parent=11 // pred_fallthru
          _
        // Predicated region
        $region21: #{tpu_custom_call.1} parent=11 // pred_check
          %p259 = pneg %p107
        $region22: #{tpu_custom_call.1} parent=11 // pred_check_branch
          %261 = sbr.rel (%p259) target = $region24
        $region23: #{tpu_custom_call.1} parent=11 // pred_region
          _
        $region24: #{tpu_custom_call.1} parent=11 // pred_fallthru
          _
        // Predicated region
        $region25: #{tpu_custom_call.1} parent=11 // pred_check
          %p262 = pneg %p128
        $region26: #{tpu_custom_call.1} parent=11 // pred_check_branch
          %264 = sbr.rel (%p262) target = $region28
        $region27: #{tpu_custom_call.1} parent=11 // pred_region
          _
        $region28: #{tpu_custom_call.1} parent=11 // pred_fallthru
          _
        // Predicated region
        $region29: #{tpu_custom_call.1} parent=11 // pred_check
          %p265 = pneg %p149
        $region30: #{tpu_custom_call.1} parent=11 // pred_check_branch
          %267 = sbr.rel (%p265) target = $region32
        $region31: #{tpu_custom_call.1} parent=11 // pred_region
          _
        $region32: #{tpu_custom_call.1} parent=11 // pred_fallthru
          _
        // Predicated region
        $region33: #{tpu_custom_call.1} parent=11 // pred_check
          %p268 = pneg %p170
        $region34: #{tpu_custom_call.1} parent=11 // pred_check_branch
          %270 = sbr.rel (%p268) target = $region36
        $region35: #{tpu_custom_call.1} parent=11 // pred_region
          _
        $region36: #{tpu_custom_call.1} parent=11 // pred_fallthru
          _
        // Predicated region
        $region37: #{tpu_custom_call.1} parent=11 // pred_check
          %p271 = pneg %p191
        $region38: #{tpu_custom_call.1} parent=11 // pred_check_branch
          %273 = sbr.rel (%p271) target = $region40
        $region39: #{tpu_custom_call.1} parent=11 // pred_region
          _
        $region40: #{tpu_custom_call.1} parent=11 // pred_fallthru
          _
        // Predicated region
        $region41: #{tpu_custom_call.1} parent=11 // pred_check
          %p274 = pneg %p212
        $region42: #{tpu_custom_call.1} parent=11 // pred_check_branch
          %276 = sbr.rel (%p274) target = $region44
        $region43: #{tpu_custom_call.1} parent=11 // pred_region
          _
        $region44: #{tpu_custom_call.1} parent=11 // pred_fallthru
          _
      $region12: #{tpu_custom_call.1} parent=5 // pred_fallthru
        _
      %p277 = scmp.lt.s32.totalorder %s18, 2
      // Predicated region
      $region45: #{tpu_custom_call.1} parent=5 // pred_check
        %p278 = pneg %p277
      $region46: #{tpu_custom_call.1} parent=5 // pred_check_branch
        %280 = sbr.rel (%p278) target = $region48
      $region47: #{tpu_custom_call.1} parent=5 // pred_region
        // Predicated region
        $region49: #{tpu_custom_call.1} parent=47 // pred_check
          %p281 = pneg %p38
        $region50: #{tpu_custom_call.1} parent=47 // pred_check_branch
          %283 = sbr.rel (%p281) target = $region52
        $region51: #{tpu_custom_call.1} parent=47 // pred_region
          %p284 = scmp.lt.s32.totalorder %s18, 1
          %s285 = scalar_select %p284, %s18, 1
          %s286 = smul.addr %s285, 2
          %s287 = smul.addr %s286, 4
          %s288 = scalar_lea.vmem %s0, %s287
        $region52: #{tpu_custom_call.1} parent=47 // pred_fallthru
          _
      $region48: #{tpu_custom_call.1} parent=5 // pred_fallthru
        _
      %p289 = scmp.le.s32.totalorder 1, %s18
      %p290 = scmp.lt.s32.totalorder %s18, 3
      %p291 = pnand %p289, %p290
      %p292 = pneg %p291
      // Predicated region
      $region53: #{tpu_custom_call.1} parent=5 // pred_check
        _
      $region54: #{tpu_custom_call.1} parent=5 // pred_check_branch
        %294 = sbr.rel (%p291) target = $region56
      $region55: #{tpu_custom_call.1} parent=5 // pred_region
        %s295 = ssub.s32 %s18, 1
        %p296 = scmp.lt.s32.totalorder %s23, 1
        %s297 = scalar_select %p296, %s23, 1
        %s298 = smul.addr %s297, 2
        %s299 = smul.addr %s298, 4
        %s300 = scalar_lea.vmem %s0, %s299
        %p301 = pneg %p44
        %p302 = pneg %p41
        %p303 = pneg %p65
        %p304 = pneg %p62
        %p305 = pneg %p86
        %p306 = pneg %p83
        %p307 = pneg %p107
        %p308 = pneg %p104
        %p309 = pneg %p128
        %p310 = pneg %p125
        %p311 = pneg %p149
        %p312 = pneg %p146
        %p313 = pneg %p170
        %p314 = pneg %p167
        %p315 = pneg %p191
        %p316 = pneg %p188
        %p317 = pneg %p212
        %p318 = pneg %p209
        %p319 = pneg %p238
        %p320 = pneg %p235
        %s321 = sand.u32 %s225, 1
        %s322 = scalar_lea.sflag [#allocation5], %s321
        %s323 = sand.u32 %s225, 1
        %s324 = smul.addr %s323, 8
        %s325 = scalar_lea.vmem [#allocation4], %s324
        %p326 = scmp.lt.s32.totalorder %s23, 1
        %s327 = scalar_select %p326, %s23, 1
        %s328 = smul.addr %s327, 2
        %s329 = smul.addr %s328, 4
        %s330 = scalar_lea.vmem %s0, %s329
        %v331 = vld [vmem:[%s7] sm:$0x3]
        %v332 = vld [vmem:[%s8] sm:$0x3]
        %333 = vst [vmem:[#allocation2] sm:$0xff] 0.0
        %334 = vst [vmem:[#allocation2 + $0x8] sm:$0xff] 0.0
        %v335 = vld [vmem:[%s330] sm:$0xff]
        %336 = vst [vmem:[#allocation2 + $0x4] sm:$0xff] %v335
        %v337 = vld [vmem:[#allocation2] sm:$0xff]
        %v338 = vld [vmem:[#allocation2 + $0x8] sm:$0xf]
        %v340 = vlaneseq
        %v341 = vshrl.u32 %v340, 7
        %v342 = vsub.s32 0, %v341
        %v343 = vrot.slane %v331, %v342
        %v344 = vlaneseq
        %v345 = vshrl.u32 %v344, 7
        %v346 = vsub.s32 1, %v345
        %v347 = vrot.slane %v331, %v346
        %v348 = vcombine.low %v343, %v347
        %349 = vrot.lane.b32.xlu0 %v348, 111
        %v350 = vpop.permute.xlu0 %349
        %v351 = vrot.slane %v350, 4
        %vm352 = vcmask 908288
        %v353 = vsel %vm352, %v351, %v350
        %v356 = vmul.f32 %v337, %v353
        %v357 = vmul.f32 %v338, %v351
        %v360 = vcombine.high %v356, %v356
        %361 = vrot.lane.b32.xlu0 %v356, 17
        %v362 = vpop.permute.xlu0 %361
        %363 = vrot.lane.b32.xlu0 %v360, 17
        %v364 = vpop.permute.xlu0 %363
        %365 = vrot.lane.b32.xlu0 %v357, 17
        %v366 = vpop.permute.xlu0 %365
        %vm367 = vcmask 138240
        %v368 = vsel %vm367, %v362, %v364
        %v369 = vsel %vm367, %v364, %v366
        %372 = vst [vmem:[#allocation3] sm:$0xf] %v368
        %373 = vst [vmem:[#allocation3 + $0x8] sm:$0xf] %v369
        %v374 = vld [vmem:[#allocation2] sm:$0xff]
        %v375 = vld [vmem:[#allocation2 + $0x8] sm:$0xf]
        %v378 = vcombine.low %v374, %v374
        %v379 = vcombine.low %v375, %v375
        %380 = vrot.lane.b32.xlu0 %v378, 16
        %v381 = vpop.permute.xlu0 %380
        %382 = vrot.lane.b32.xlu0 %v374, 16
        %v383 = vpop.permute.xlu0 %382
        %384 = vrot.lane.b32.xlu0 %v379, 16
        %v385 = vpop.permute.xlu0 %384
        %vm386 = vcmask 130048
        %v387 = vsel %vm386, %v381, %v383
        %v388 = vsel %vm386, %v383, %v385
        %391 = vst [vmem:[#allocation3] sm:$0xf0] %v387
        %392 = vst [vmem:[#allocation3 + $0x8] sm:$0xf0] %v388
        %v393 = vld [vmem:[#allocation2] sm:$0xff]
        %v394 = vld [vmem:[#allocation2 + $0x8] sm:$0xf]
        %v396 = vlaneseq
        %v397 = vshrl.u32 %v396, 7
        %v398 = vsub.s32 0, %v397
        %v399 = vrot.slane %v332, %v398
        %v400 = vlaneseq
        %v401 = vshrl.u32 %v400, 7
        %v402 = vsub.s32 1, %v401
        %v403 = vrot.slane %v332, %v402
        %v404 = vcombine.low %v399, %v403
        %405 = vrot.lane.b32.xlu0 %v404, 113
        %v406 = vpop.permute.xlu0 %405
        %v407 = vrot.slane %v406, 4
        %vm408 = vcmask 924672
        %v409 = vsel %vm408, %v407, %v406
        %v412 = vmul.f32 %v393, %v409
        %v413 = vmul.f32 %v394, %v407
        %v416 = vcombine.high %v412, %v412
        %417 = vrot.lane.b32.xlu0 %v412, 15
        %v418 = vpop.permute.xlu0 %417
        %419 = vrot.lane.b32.xlu0 %v416, 15
        %v420 = vpop.permute.xlu0 %419
        %421 = vrot.lane.b32.xlu0 %v413, 15
        %v422 = vpop.permute.xlu0 %421
        %vm423 = vcmask 121856
        %v424 = vsel %vm423, %v418, %v420
        %v425 = vsel %vm423, %v420, %v422
        %428 = vst [vmem:[#allocation3 + $0x10] sm:$0xf] %v424
        %429 = vst [vmem:[#allocation3 + $0x18] sm:$0xf] %v425
        %v430 = vld [vmem:[#allocation2] sm:$0xff]
        %v431 = vld [vmem:[#allocation2 + $0x8] sm:$0xf]
        %432 = vrot.lane.b32.xlu0 %v348, 127
        %v433 = vpop.permute.xlu0 %432
        %v434 = vrot.slane %v433, 4
        %vm435 = vcmask 1039360
        %v436 = vsel %vm435, %v434, %v433
        %v439 = vmul.f32 %v430, %v436
        %v440 = vmul.f32 %v431, %v434
        %v443 = vcombine.low %v439, %v439
        %v444 = vcombine.low %v440, %v440
        %445 = vrot.lane.b32.xlu0 %v443, 1
        %v446 = vpop.permute.xlu0 %445
        %447 = vrot.lane.b32.xlu0 %v439, 1
        %v448 = vpop.permute.xlu0 %447
        %449 = vrot.lane.b32.xlu0 %v444, 1
        %v450 = vpop.permute.xlu0 %449
        %vm451 = vcmask 7168
        %v452 = vsel %vm451, %v446, %v448
        %v453 = vsel %vm451, %v448, %v450
        %456 = vst [vmem:[#allocation3 + $0x10] sm:$0xf0] %v452
        %457 = vst [vmem:[#allocation3 + $0x18] sm:$0xf0] %v453
        %v458 = vld [vmem:[#allocation2 + $0x4] sm:$0xff]
        %v460 = vcombine.high %v458, %v458
        %462 = vst [vmem:[#allocation3 + $0x20] sm:$0xf] %v458
        %463 = vst [vmem:[#allocation3 + $0x28] sm:$0xf] %v460
        %v464 = vld [vmem:[#allocation2 + $0x4] sm:$0xff]
        %v465 = vld [vmem:[#allocation2 + $0xc] sm:$0xf]
        %466 = vrot.lane.b32.xlu0 %v404, 1
        %v467 = vpop.permute.xlu0 %466
        %v468 = vrot.slane %v467, 4
        %v469 = vsel %vm451, %v468, %v467
        %v472 = vmul.f32 %v464, %v469
        %v473 = vmul.f32 %v465, %v468
        %v476 = vcombine.low %v472, %v472
        %v477 = vcombine.low %v473, %v473
        %478 = vrot.lane.b32.xlu0 %v476, 127
        %v479 = vpop.permute.xlu0 %478
        %480 = vrot.lane.b32.xlu0 %v472, 127
        %v481 = vpop.permute.xlu0 %480
        %482 = vrot.lane.b32.xlu0 %v477, 127
        %v483 = vpop.permute.xlu0 %482
        %v484 = vsel %vm435, %v479, %v481
        %v485 = vsel %vm435, %v481, %v483
        %488 = vst [vmem:[#allocation3 + $0x20] sm:$0xf0] %v484
        %489 = vst [vmem:[#allocation3 + $0x28] sm:$0xf0] %v485
        %v490 = vld [vmem:[#allocation2 + $0x4] sm:$0xff]
        %v491 = vld [vmem:[#allocation2 + $0xc] sm:$0xf]
        %492 = vrot.lane.b32.xlu0 %v348, 15
        %v493 = vpop.permute.xlu0 %492
        %v494 = vrot.slane %v493, 4
        %v495 = vsel %vm423, %v494, %v493
        %v498 = vmul.f32 %v490, %v495
        %v499 = vmul.f32 %v491, %v494
        %v502 = vcombine.high %v498, %v498
        %503 = vrot.lane.b32.xlu0 %v498, 113
        %v504 = vpop.permute.xlu0 %503
        %505 = vrot.lane.b32.xlu0 %v502, 113
        %v506 = vpop.permute.xlu0 %505
        %507 = vrot.lane.b32.xlu0 %v499, 113
        %v508 = vpop.permute.xlu0 %507
        %v509 = vsel %vm408, %v504, %v506
        %v510 = vsel %vm408, %v506, %v508
        %513 = vst [vmem:[#allocation3 + $0x30] sm:$0xf] %v509
        %514 = vst [vmem:[#allocation3 + $0x38] sm:$0xf] %v510
        %v515 = vld [vmem:[#allocation2 + $0x4] sm:$0xff]
        %v516 = vld [vmem:[#allocation2 + $0xc] sm:$0xf]
        %v519 = vcombine.low %v515, %v515
        %v520 = vcombine.low %v516, %v516
        %521 = vrot.lane.b32.xlu0 %v519, 112
        %v522 = vpop.permute.xlu0 %521
        %523 = vrot.lane.b32.xlu0 %v515, 112
        %v524 = vpop.permute.xlu0 %523
        %525 = vrot.lane.b32.xlu0 %v520, 112
        %v526 = vpop.permute.xlu0 %525
        %vm527 = vcmask 916480
        %v528 = vsel %vm527, %v522, %v524
        %v529 = vsel %vm527, %v524, %v526
        %532 = vst [vmem:[#allocation3 + $0x30] sm:$0xf0] %v528
        %533 = vst [vmem:[#allocation3 + $0x38] sm:$0xf0] %v529
        %v534 = vld [vmem:[#allocation2 + $0x4] sm:$0xff]
        %v535 = vld [vmem:[#allocation2 + $0xc] sm:$0xf]
        %536 = vrot.lane.b32.xlu0 %v404, 17
        %v537 = vpop.permute.xlu0 %536
        %v538 = vrot.slane %v537, 4
        %v539 = vsel %vm367, %v538, %v537
        %v542 = vmul.f32 %v534, %v539
        %v543 = vmul.f32 %v535, %v538
        %v546 = vcombine.high %v542, %v542
        %547 = vrot.lane.b32.xlu0 %v542, 111
        %v548 = vpop.permute.xlu0 %547
        %549 = vrot.lane.b32.xlu0 %v546, 111
        %v550 = vpop.permute.xlu0 %549
        %551 = vrot.lane.b32.xlu0 %v543, 111
        %v552 = vpop.permute.xlu0 %551
        %v553 = vsel %vm352, %v548, %v550
        %v554 = vsel %vm352, %v550, %v552
        %557 = vst [vmem:[#allocation3 + $0x40] sm:$0xf] %v553
        %558 = vst [vmem:[#allocation3 + $0x48] sm:$0xf] %v554
        %v559 = vld [vmem:[%s1] sm:$0xf]
        %v560 = vld [vmem:[#allocation3] sm:$0xff]
        %v561 = vld [vmem:[#allocation3 + $0x8] sm:$0xff]
        %v562 = vld [vmem:[#allocation3 + $0x10] sm:$0xff]
        %v563 = vld [vmem:[#allocation3 + $0x18] sm:$0xff]
        %v564 = vld [vmem:[#allocation3 + $0x20] sm:$0xff]
        %v565 = vld [vmem:[#allocation3 + $0x28] sm:$0xff]
        %v566 = vld [vmem:[#allocation3 + $0x30] sm:$0xff]
        %v567 = vld [vmem:[#allocation3 + $0x38] sm:$0xff]
        %v568 = vld [vmem:[#allocation3 + $0x40] sm:$0xf]
        %v569 = vld [vmem:[#allocation3 + $0x48] sm:$0xf]
        %vm570 = vcmask 293888
        %v572 = vsel %vm570, %v559, 0
        %vm574 = vcmask 1043456
        %v576 = vsel %vm574, %v568, 0
        %v579 = vsel %vm574, %v569, 0
        %581 = vmatprep.subr.mxu0 %v561
        %582 = vmatpush1.msra.mxu0 %v560
        %583 = vmatprep.subr.mxu0 %v563
        %584 = vmatpush1.msra.mxu0 %v562
        %585 = vmatprep.subr.mxu0 %v565
        %586 = vmatpush1.msra.mxu0 %v564
        %587 = vmatprep.subr.mxu0 %v567
        %588 = vmatpush1.msra.mxu0 %v566
        %589 = vmatprep.subr.mxu0 %v579
        %590 = vmatpush1.msra.mxu0 %v576
        %591 = vmatprep.subr.mxu0 0.0
        %592 = vmatpush1.msra.mxu0 0.0
        %593 = vmatprep.subr.mxu0 0.0
        %594 = vmatpush1.msra.mxu0 0.0
        %595 = vmatprep.subr.mxu0 0.0
        %596 = vmatpush1.msra.mxu0 0.0
        %597 = vmatprep.subr.mxu0 0.0
        %598 = vmatpush1.msra.mxu0 0.0
        %599 = vmatprep.subr.mxu0 0.0
        %600 = vmatpush1.msra.mxu0 0.0
        %601 = vmatprep.subr.mxu0 0.0
        %602 = vmatpush1.msra.mxu0 0.0
        %603 = vmatprep.subr.mxu0 0.0
        %604 = vmatpush1.msra.mxu0 0.0
        %605 = vmatprep.subr.mxu0 0.0
        %606 = vmatpush1.msra.mxu0 0.0
        %607 = vmatprep.subr.mxu0 0.0
        %608 = vmatpush1.msra.mxu0 0.0
        %609 = vmatprep.subr.mxu0 0.0
        %610 = vmatpush1.msra.mxu0 0.0
        %611 = vmatprep.subr.mxu0 0.0
        %612 = vmatpush1.msra.mxu0 0.0
        %613 = vmatprep.subr.mxu0 0.0
        %614 = vmatpush1.msra.mxu0 0.0
        %615 = vmatprep.subr.mxu0 0.0
        %616 = vmatpush1.msra.mxu0 0.0
        %617 = vmatprep.subr.mxu0 0.0
        %618 = vmatpush1.msra.mxu0 0.0
        %619 = vmatprep.subr.mxu0 0.0
        %620 = vmatpush1.msra.mxu0 0.0
        %621 = vmatprep.subr.mxu0 0.0
        %622 = vmatpush1.msra.mxu0 0.0
        %623 = vmatprep.subr.mxu0 0.0
        %624 = vmatpush1.msra.mxu0 0.0
        %625 = vmatprep.subr.mxu0 0.0
        %626 = vmatpush1.msra.mxu0 0.0
        %627 = vmatprep.subr.mxu0 0.0
        %628 = vmatpush1.msra.mxu0 0.0
        %629 = vmatprep.subr.mxu0 0.0
        %630 = vmatpush1.msra.mxu0 0.0
        %631 = vmatprep.subr.mxu0 0.0
        %632 = vmatpush1.msra.mxu0 0.0
        %633 = vmatprep.subr.mxu0 0.0
        %634 = vmatpush1.msra.mxu0 0.0
        %635 = vmatprep.subr.mxu0 0.0
        %636 = vmatpush1.msra.mxu0 0.0
        %637 = vmatprep.subr.mxu0 0.0
        %638 = vmatpush1.msra.mxu0 0.0
        %639 = vmatprep.subr.mxu0 0.0
        %640 = vmatpush1.msra.mxu0 0.0
        %641 = vmatprep.subr.mxu0 0.0
        %642 = vmatpush1.msra.mxu0 0.0
        %643 = vmatprep.subr.mxu0 0.0
        %644 = vmatpush1.msra.mxu0 0.0
        %645 = vmatprep.mubr.f32.mxu0 0.0
        %646 = vmatmul.mubr.f32.gmra.mrb[0].mxu0 %v572
        %v647 = vpop.f32.mrb[0].mxu0
        %v648 = vadd.f32 0.0, %v647
        %v649 = vpop.f32.mrb[0].mxu0
        %v650 = vadd.f32 0.0, %v649
        %651 = vdwg.mxu0
        %v652 = vld [vmem:[%s3] sm:$0xf]
        %654 = vset.pattern.permute.xlu0 0
        %655 = vperm.xlu0 %654, %v652
        %v656 = vpop.permute.xlu0 %655
        %v658 = vmul.f32 %v648, %v656
        %v659 = vmul.f32 %v650, %v656
        %v660 = vld [vmem:[%s4] sm:$0xf]
        %662 = vset.pattern.permute.xlu0 0
        %663 = vperm.xlu0 %662, %v660
        %v664 = vpop.permute.xlu0 %663
        %v666 = vadd.f32 %v658, %v664
        %v667 = vadd.f32 %v659, %v664
        %v668 = vmax.f32 %v666, 0.0
        %v669 = vmax.f32 %v667, 0.0
        %v672 = vcombine.low %v668, %v669
        %674 = vst [vmem:[#allocation2 + $0x4] sm:$0xff] %v672
        %v675 = vld [vmem:[#allocation2] sm:$0xff]
        %v676 = vld [vmem:[#allocation2 + $0x8] sm:$0xf]
        %v677 = vmul.f32 %v675, %v353
        %v678 = vmul.f32 %v676, %v351
        %v681 = vcombine.high %v677, %v677
        %682 = vrot.lane.b32.xlu0 %v677, 17
        %v683 = vpop.permute.xlu0 %682
        %684 = vrot.lane.b32.xlu0 %v681, 17
        %v685 = vpop.permute.xlu0 %684
        %686 = vrot.lane.b32.xlu0 %v678, 17
        %v687 = vpop.permute.xlu0 %686
        %v688 = vsel %vm367, %v683, %v685
        %v689 = vsel %vm367, %v685, %v687
        %692 = vst [vmem:[#allocation3] sm:$0xf] %v688
        %693 = vst [vmem:[#allocation3 + $0x8] sm:$0xf] %v689
        %v694 = vld [vmem:[#allocation2] sm:$0xff]
        %v695 = vld [vmem:[#allocation2 + $0x8] sm:$0xf]
        %v698 = vcombine.low %v694, %v694
        %v699 = vcombine.low %v695, %v695
        %700 = vrot.lane.b32.xlu0 %v698, 16
        %v701 = vpop.permute.xlu0 %700
        %702 = vrot.lane.b32.xlu0 %v694, 16
        %v703 = vpop.permute.xlu0 %702
        %704 = vrot.lane.b32.xlu0 %v699, 16
        %v705 = vpop.permute.xlu0 %704
        %v706 = vsel %vm386, %v701, %v703
        %v707 = vsel %vm386, %v703, %v705
        %710 = vst [vmem:[#allocation3] sm:$0xf0] %v706
        %711 = vst [vmem:[#allocation3 + $0x8] sm:$0xf0] %v707
        %v712 = vld [vmem:[#allocation2] sm:$0xff]
        %v713 = vld [vmem:[#allocation2 + $0x8] sm:$0xf]
        %v714 = vmul.f32 %v712, %v409
        %v715 = vmul.f32 %v713, %v407
        %v718 = vcombine.high %v714, %v714
        %719 = vrot.lane.b32.xlu0 %v714, 15
        %v720 = vpop.permute.xlu0 %719
        %721 = vrot.lane.b32.xlu0 %v718, 15
        %v722 = vpop.permute.xlu0 %721
        %723 = vrot.lane.b32.xlu0 %v715, 15
        %v724 = vpop.permute.xlu0 %723
        %v725 = vsel %vm423, %v720, %v722
        %v726 = vsel %vm423, %v722, %v724
        %729 = vst [vmem:[#allocation3 + $0x10] sm:$0xf] %v725
        %730 = vst [vmem:[#allocation3 + $0x18] sm:$0xf] %v726
        %v731 = vld [vmem:[#allocation2] sm:$0xff]
        %v732 = vld [vmem:[#allocation2 + $0x8] sm:$0xf]
        %v733 = vmul.f32 %v731, %v436
        %v734 = vmul.f32 %v732, %v434
        %v737 = vcombine.low %v733, %v733
        %v738 = vcombine.low %v734, %v734
        %739 = vrot.lane.b32.xlu0 %v737, 1
        %v740 = vpop.permute.xlu0 %739
        %741 = vrot.lane.b32.xlu0 %v733, 1
        %v742 = vpop.permute.xlu0 %741
        %743 = vrot.lane.b32.xlu0 %v738, 1
        %v744 = vpop.permute.xlu0 %743
        %v745 = vsel %vm451, %v740, %v742
        %v746 = vsel %vm451, %v742, %v744
        %749 = vst [vmem:[#allocation3 + $0x10] sm:$0xf0] %v745
        %750 = vst [vmem:[#allocation3 + $0x18] sm:$0xf0] %v746
        %v751 = vld [vmem:[#allocation2 + $0x4] sm:$0xff]
        %v753 = vcombine.high %v751, %v751
        %755 = vst [vmem:[#allocation3 + $0x20] sm:$0xf] %v751
        %756 = vst [vmem:[#allocation3 + $0x28] sm:$0xf] %v753
        %v757 = vld [vmem:[#allocation2 + $0x4] sm:$0xff]
        %v758 = vld [vmem:[#allocation2 + $0xc] sm:$0xf]
        %v759 = vmul.f32 %v757, %v469
        %v760 = vmul.f32 %v758, %v468
        %v763 = vcombine.low %v759, %v759
        %v764 = vcombine.low %v760, %v760
        %765 = vrot.lane.b32.xlu0 %v763, 127
        %v766 = vpop.permute.xlu0 %765
        %767 = vrot.lane.b32.xlu0 %v759, 127
        %v768 = vpop.permute.xlu0 %767
        %769 = vrot.lane.b32.xlu0 %v764, 127
        %v770 = vpop.permute.xlu0 %769
        %v771 = vsel %vm435, %v766, %v768
        %v772 = vsel %vm435, %v768, %v770
        %775 = vst [vmem:[#allocation3 + $0x20] sm:$0xf0] %v771
        %776 = vst [vmem:[#allocation3 + $0x28] sm:$0xf0] %v772
        %v777 = vld [vmem:[#allocation2 + $0x4] sm:$0xff]
        %v778 = vld [vmem:[#allocation2 + $0xc] sm:$0xf]
        %v779 = vmul.f32 %v777, %v495
        %v780 = vmul.f32 %v778, %v494
        %v783 = vcombine.high %v779, %v779
        %784 = vrot.lane.b32.xlu0 %v779, 113
        %v785 = vpop.permute.xlu0 %784
        %786 = vrot.lane.b32.xlu0 %v783, 113
        %v787 = vpop.permute.xlu0 %786
        %788 = vrot.lane.b32.xlu0 %v780, 113
        %v789 = vpop.permute.xlu0 %788
        %v790 = vsel %vm408, %v785, %v787
        %v791 = vsel %vm408, %v787, %v789
        %794 = vst [vmem:[#allocation3 + $0x30] sm:$0xf] %v790
        %795 = vst [vmem:[#allocation3 + $0x38] sm:$0xf] %v791
        %v796 = vld [vmem:[#allocation2 + $0x4] sm:$0xff]
        %v797 = vld [vmem:[#allocation2 + $0xc] sm:$0xf]
        %v800 = vcombine.low %v796, %v796
        %v801 = vcombine.low %v797, %v797
        %802 = vrot.lane.b32.xlu0 %v800, 112
        %v803 = vpop.permute.xlu0 %802
        %804 = vrot.lane.b32.xlu0 %v796, 112
        %v805 = vpop.permute.xlu0 %804
        %806 = vrot.lane.b32.xlu0 %v801, 112
        %v807 = vpop.permute.xlu0 %806
        %v808 = vsel %vm527, %v803, %v805
        %v809 = vsel %vm527, %v805, %v807
        %812 = vst [vmem:[#allocation3 + $0x30] sm:$0xf0] %v808
        %813 = vst [vmem:[#allocation3 + $0x38] sm:$0xf0] %v809
        %v814 = vld [vmem:[#allocation2 + $0x4] sm:$0xff]
        %v815 = vld [vmem:[#allocation2 + $0xc] sm:$0xf]
        %v816 = vmul.f32 %v814, %v539
        %v817 = vmul.f32 %v815, %v538
        %v820 = vcombine.high %v816, %v816
        %821 = vrot.lane.b32.xlu0 %v816, 111
        %v822 = vpop.permute.xlu0 %821
        %823 = vrot.lane.b32.xlu0 %v820, 111
        %v824 = vpop.permute.xlu0 %823
        %825 = vrot.lane.b32.xlu0 %v817, 111
        %v826 = vpop.permute.xlu0 %825
        %v827 = vsel %vm352, %v822, %v824
        %v828 = vsel %vm352, %v824, %v826
        %831 = vst [vmem:[#allocation3 + $0x40] sm:$0xf] %v827
        %832 = vst [vmem:[#allocation3 + $0x48] sm:$0xf] %v828
        %v833 = vld [vmem:[%s2] sm:$0xf]
        %v834 = vld [vmem:[#allocation3] sm:$0xff]
        %v835 = vld [vmem:[#allocation3 + $0x8] sm:$0xff]
        %v836 = vld [vmem:[#allocation3 + $0x10] sm:$0xff]
        %v837 = vld [vmem:[#allocation3 + $0x18] sm:$0xff]
        %v838 = vld [vmem:[#allocation3 + $0x20] sm:$0xff]
        %v839 = vld [vmem:[#allocation3 + $0x28] sm:$0xff]
        %v840 = vld [vmem:[#allocation3 + $0x30] sm:$0xff]
        %v841 = vld [vmem:[#allocation3 + $0x38] sm:$0xff]
        %v842 = vld [vmem:[#allocation3 + $0x40] sm:$0xf]
        %v843 = vld [vmem:[#allocation3 + $0x48] sm:$0xf]
        %v845 = vsel %vm570, %v833, 0
        %v848 = vsel %vm574, %v842, 0
        %v851 = vsel %vm574, %v843, 0
        %853 = vmatprep.subr.mxu0 %v835
        %854 = vmatpush1.msra.mxu0 %v834
        %855 = vmatprep.subr.mxu0 %v837
        %856 = vmatpush1.msra.mxu0 %v836
        %857 = vmatprep.subr.mxu0 %v839
        %858 = vmatpush1.msra.mxu0 %v838
        %859 = vmatprep.subr.mxu0 %v841
        %860 = vmatpush1.msra.mxu0 %v840
        %861 = vmatprep.subr.mxu0 %v851
        %862 = vmatpush1.msra.mxu0 %v848
        %863 = vmatprep.subr.mxu0 0.0
        %864 = vmatpush1.msra.mxu0 0.0
        %865 = vmatprep.subr.mxu0 0.0
        %866 = vmatpush1.msra.mxu0 0.0
        %867 = vmatprep.subr.mxu0 0.0
        %868 = vmatpush1.msra.mxu0 0.0
        %869 = vmatprep.subr.mxu0 0.0
        %870 = vmatpush1.msra.mxu0 0.0
        %871 = vmatprep.subr.mxu0 0.0
        %872 = vmatpush1.msra.mxu0 0.0
        %873 = vmatprep.subr.mxu0 0.0
        %874 = vmatpush1.msra.mxu0 0.0
        %875 = vmatprep.subr.mxu0 0.0
        %876 = vmatpush1.msra.mxu0 0.0
        %877 = vmatprep.subr.mxu0 0.0
        %878 = vmatpush1.msra.mxu0 0.0
        %879 = vmatprep.subr.mxu0 0.0
        %880 = vmatpush1.msra.mxu0 0.0
        %881 = vmatprep.subr.mxu0 0.0
        %882 = vmatpush1.msra.mxu0 0.0
        %883 = vmatprep.subr.mxu0 0.0
        %884 = vmatpush1.msra.mxu0 0.0
        %885 = vmatprep.subr.mxu0 0.0
        %886 = vmatpush1.msra.mxu0 0.0
        %887 = vmatprep.subr.mxu0 0.0
        %888 = vmatpush1.msra.mxu0 0.0
        %889 = vmatprep.subr.mxu0 0.0
        %890 = vmatpush1.msra.mxu0 0.0
        %891 = vmatprep.subr.mxu0 0.0
        %892 = vmatpush1.msra.mxu0 0.0
        %893 = vmatprep.subr.mxu0 0.0
        %894 = vmatpush1.msra.mxu0 0.0
        %895 = vmatprep.subr.mxu0 0.0
        %896 = vmatpush1.msra.mxu0 0.0
        %897 = vmatprep.subr.mxu0 0.0
        %898 = vmatpush1.msra.mxu0 0.0
        %899 = vmatprep.subr.mxu0 0.0
        %900 = vmatpush1.msra.mxu0 0.0
        %901 = vmatprep.subr.mxu0 0.0
        %902 = vmatpush1.msra.mxu0 0.0
        %903 = vmatprep.subr.mxu0 0.0
        %904 = vmatpush1.msra.mxu0 0.0
        %905 = vmatprep.subr.mxu0 0.0
        %906 = vmatpush1.msra.mxu0 0.0
        %907 = vmatprep.subr.mxu0 0.0
        %908 = vmatpush1.msra.mxu0 0.0
        %909 = vmatprep.subr.mxu0 0.0
        %910 = vmatpush1.msra.mxu0 0.0
        %911 = vmatprep.subr.mxu0 0.0
        %912 = vmatpush1.msra.mxu0 0.0
        %913 = vmatprep.subr.mxu0 0.0
        %914 = vmatpush1.msra.mxu0 0.0
        %915 = vmatprep.subr.mxu0 0.0
        %916 = vmatpush1.msra.mxu0 0.0
        %917 = vmatprep.mubr.f32.mxu0 0.0
        %918 = vmatmul.mubr.f32.gmra.mrb[0].mxu0 %v845
        %v919 = vpop.f32.mrb[0].mxu0
        %v920 = vadd.f32 0.0, %v919
        %v921 = vpop.f32.mrb[0].mxu0
        %v922 = vadd.f32 0.0, %v921
        %923 = vdwg.mxu0
        %v924 = vld [vmem:[%s5] sm:$0xf]
        %926 = vset.pattern.permute.xlu0 0
        %927 = vperm.xlu0 %926, %v924
        %v928 = vpop.permute.xlu0 %927
        %v930 = vmul.f32 %v920, %v928
        %v931 = vmul.f32 %v922, %v928
        %v932 = vld [vmem:[%s6] sm:$0xf]
        %934 = vset.pattern.permute.xlu0 0
        %935 = vperm.xlu0 %934, %v932
        %v936 = vpop.permute.xlu0 %935
        %v938 = vadd.f32 %v930, %v936
        %v939 = vadd.f32 %v931, %v936
        %v941 = vcombine.high %v335, %v335
        %v943 = vadd.f32 %v938, %v335
        %v944 = vadd.f32 %v939, %v941
        %v945 = vmax.f32 %v943, 0.0
        %v946 = vmax.f32 %v944, 0.0
        %v949 = vcombine.low %v945, %v946
        %951 = vst [vmem:[%s325] sm:$0xff] %v949
        %s952 = sand.u32 %s225, 1
        %s953 = scalar_lea.sflag [#allocation5], %s952
        %s954 = sand.u32 %s225, 1
        %s955 = smul.addr %s954, 8
        %s956 = scalar_lea.vmem [#allocation4], %s955
        // Predicated region
        $region57: #{tpu_custom_call.1} parent=55 // pred_check
          %p957 = pneg %p235
        $region58: #{tpu_custom_call.1} parent=55 // pred_check_branch
          %959 = sbr.rel (%p957) target = $region60
        $region59: #{tpu_custom_call.1} parent=55 // pred_region
          %s961 = ssub.s32 128, 128
          %962 = vsyncadd %s953, %s961
          %s963 = smul.addr %s23, 2
          %s964 = smul.addr %s963, 64
          %s965 = scalar_lea.hbm %s9, %s964
          %s967 = sshll.u32 %s956, 4
          %s968 = int_to_ptr.vmem [resolvable:$true] %s967
          %970 = dma.vmem_to_hbm [thread:$0]  %s968, 128, %s965, %s953
        $region60: #{tpu_custom_call.1} parent=55 // pred_fallthru
          _
      $region56: #{tpu_custom_call.1} parent=5 // pred_fallthru
        _
      %p971 = scmp.le.s32.totalorder 2, %s18
      // Predicated region
      $region61: #{tpu_custom_call.1} parent=5 // pred_check
        %p972 = pneg %p971
      $region62: #{tpu_custom_call.1} parent=5 // pred_check_branch
        %974 = sbr.rel (%p972) target = $region64
      $region63: #{tpu_custom_call.1} parent=5 // pred_region
        %s975 = ssub.s32 %s18, 2
        // Predicated region
        $region65: #{tpu_custom_call.1} parent=63 // pred_check
          %p976 = pneg %p241
        $region66: #{tpu_custom_call.1} parent=63 // pred_check_branch
          %978 = sbr.rel (%p976) target = $region68
        $region67: #{tpu_custom_call.1} parent=63 // pred_region
          %s979 = sand.u32 %s226, 1
          %s980 = scalar_lea.sflag [#allocation5], %s979
          %s981 = sand.u32 %s226, 1
          %s982 = smul.addr %s981, 8
          %s983 = scalar_lea.vmem [#allocation4], %s982
          %984 = dma.done %s980, 128
        $region68: #{tpu_custom_call.1} parent=63 // pred_fallthru
          _
      $region64: #{tpu_custom_call.1} parent=5 // pred_fallthru
        _
    $region6: #{tpu_custom_call.1} parent=1 // loop_footer
      %s22 = sadd.s32 1, %s18
    $region7: #{tpu_custom_call.1} parent=1 // loop_footer_branch
      %17 = sbr.rel target = $region3
    $region8: #{tpu_custom_call.1} parent=1 // loop_exit
      _
    %985 = vsyncpa [#allocation5], 1
    %s986 = scalar_lea.sflag [#allocation5], 1
    %987 = vsyncpa %s986, 1

</llo_original>
